<compile_context>
chip_gen: v7x
topology: tpu7x:2x2x1
jax: 0.10.0
libtpu: 0.0.40
codegen_flags: <defaults>
</compile_context>

<pallas_src>
import jax
import jax.numpy as jnp
from jax.experimental import pallas as pl
from jax.experimental.pallas import tpu as pltpu

LANE = 128        # lane padding target (feature / hidden / class dims)
DEF_TILE = 256    # node-row tile for the tiled path (perf sweep: 256-512)


def _round_up(x, m):
    return (x + m - 1) // m * m


def _vmem_limit_bytes():
    """Generation-aware scoped-VMEM budget (leave headroom for Mosaic scratch).

    v5e/v6e: 128 MiB physical -> 96 MiB budget; v7x: 64 MiB -> 48 MiB.
    """
    cap = 64 * 1024 * 1024   # conservative fallback (v7x per-TC physical VMEM)
    try:
        info = pltpu.get_tpu_info()
        for attr in ("vmem_capacity_bytes", "vmem_size_bytes", "vmem_bytes"):
            val = getattr(info, attr, None)
            if val:
                cap = int(val)
                break
    except Exception:
        pass
    return min(cap * 3 // 4, 96 * 1024 * 1024)


VMEM_LIMIT = _vmem_limit_bytes()


# --------------------------------------------------------------------------
# Path A: fully fused single call (small graphs -- everything VMEM-resident).
#   out = A @ ( relu(A @ (X W1) + b1) @ W2 ) + b2
# --------------------------------------------------------------------------
def _gcn_fused_kernel(a_ref, x_ref, w1_ref, b1_ref, w2_ref, b2_ref, o_ref):
    bf = jnp.bfloat16
    z1 = jnp.dot(x_ref[...], w1_ref[...],
                 preferred_element_type=jnp.float32).astype(bf)
    h = jnp.dot(a_ref[...], z1, preferred_element_type=jnp.float32) + b1_ref[...]
    h = jnp.maximum(h, 0.0).astype(bf)
    z2 = jnp.dot(h, w2_ref[...], preferred_element_type=jnp.float32).astype(bf)
    o_ref[...] = (jnp.dot(a_ref[...], z2, preferred_element_type=jnp.float32)
                  + b2_ref[...]).astype(o_ref.dtype)


def _gcn_fused(a_p, x_p, w1_p, b1_p, w2_p, b2_p, out_dtype):
    n_p = a_p.shape[0]
    fp = x_p.shape[1]
    hp = w1_p.shape[1]
    cp = w2_p.shape[1]
    cost = pl.CostEstimate(
        flops=2 * n_p * (fp * hp + n_p * hp + hp * cp + n_p * cp),
        transcendentals=0,
        bytes_accessed=(a_p.size * 2 + x_p.size * 2 + w1_p.size * 2
                        + w2_p.size * 2 + (hp + cp) * 4
                        + n_p * cp * jnp.dtype(out_dtype).itemsize),
    )
    return pl.pallas_call(
        _gcn_fused_kernel,
        out_shape=jax.ShapeDtypeStruct((n_p, cp), out_dtype),
        compiler_params=pltpu.CompilerParams(vmem_limit_bytes=VMEM_LIMIT),
        cost_estimate=cost,
    )(a_p, x_p, w1_p, b1_p, w2_p, b2_p)


# --------------------------------------------------------------------------
# Path B: tiled (larger graphs), 3 calls, full-depth contraction (no k loop).
# --------------------------------------------------------------------------
def _transform_kernel(x_ref, w_ref, o_ref):
    o_ref[...] = jnp.dot(x_ref[...], w_ref[...],
                         preferred_element_type=jnp.float32).astype(o_ref.dtype)


def _transform(x_p, w_p, *, tm, out_dtype):
    n_p, fp = x_p.shape
    hp = w_p.shape[1]
    cost = pl.CostEstimate(
        flops=2 * n_p * fp * hp, transcendentals=0,
        bytes_accessed=x_p.size * 2 + w_p.size * 2 + n_p * hp * 2)
    return pl.pallas_call(
        _transform_kernel,
        out_shape=jax.ShapeDtypeStruct((n_p, hp), out_dtype),
        grid=(n_p // tm,),
        in_specs=[pl.BlockSpec((tm, fp), lambda i: (i, 0)),   # X row slab
                  pl.BlockSpec((fp, hp), lambda i: (0, 0))],  # W1 resident
        out_specs=pl.BlockSpec((tm, hp), lambda i: (i, 0)),
        compiler_params=pltpu.CompilerParams(
            dimension_semantics=("parallel",), vmem_limit_bytes=VMEM_LIMIT),
        cost_estimate=cost,
    )(x_p, w_p)


def _prop1_fused_kernel(a_ref, z1_ref, b1_ref, w2_ref, o_ref):
    # Z2_tile = relu(A_tile @ Z1 + b1) @ W2   (W2 fused into the epilogue)
    h = jnp.dot(a_ref[...], z1_ref[...],
                preferred_element_type=jnp.float32) + b1_ref[...]
    h = jnp.maximum(h, 0.0).astype(w2_ref.dtype)
    o_ref[...] = jnp.dot(h, w2_ref[...],
                         preferred_element_type=jnp.float32).astype(o_ref.dtype)


def _prop1_fused(a_p, z1, b1_p, w2_p, *, tm, out_dtype):
    n_p = a_p.shape[0]
    hp = z1.shape[1]
    cp = w2_p.shape[1]
    n_tiles = n_p // tm
    cost = pl.CostEstimate(
        flops=2 * n_p * n_p * hp + 2 * n_p * hp * cp, transcendentals=0,
        bytes_accessed=(a_p.size * 2
                        + (z1.size * 2 + hp * 4 + w2_p.size * 2) * n_tiles
                        + n_p * cp * jnp.dtype(out_dtype).itemsize))
    return pl.pallas_call(
        _prop1_fused_kernel,
        out_shape=jax.ShapeDtypeStruct((n_p, cp), out_dtype),
        grid=(n_tiles,),
        in_specs=[pl.BlockSpec((tm, n_p), lambda i: (i, 0)),   # A row slab
                  pl.BlockSpec((n_p, hp), lambda i: (0, 0)),   # Z1 resident
                  pl.BlockSpec((1, hp), lambda i: (0, 0)),     # b1 resident
                  pl.BlockSpec((hp, cp), lambda i: (0, 0))],   # W2 resident
        out_specs=pl.BlockSpec((tm, cp), lambda i: (i, 0)),
        compiler_params=pltpu.CompilerParams(
            dimension_semantics=("parallel",), vmem_limit_bytes=VMEM_LIMIT),
        cost_estimate=cost,
    )(a_p, z1, b1_p, w2_p)


def _prop2_kernel(a_ref, z_ref, b_ref, o_ref):
    o_ref[...] = (jnp.dot(a_ref[...], z_ref[...],
                          preferred_element_type=jnp.float32)
                  + b_ref[...]).astype(o_ref.dtype)


def _prop2(a_p, z2, b2_p, *, tm, out_dtype):
    n_p = a_p.shape[0]
    cp = z2.shape[1]
    n_tiles = n_p // tm
    cost = pl.CostEstimate(
        flops=2 * n_p * n_p * cp, transcendentals=0,
        bytes_accessed=(a_p.size * 2 + (z2.size * 2 + cp * 4) * n_tiles
                        + n_p * cp * jnp.dtype(out_dtype).itemsize))
    return pl.pallas_call(
        _prop2_kernel,
        out_shape=jax.ShapeDtypeStruct((n_p, cp), out_dtype),
        grid=(n_tiles,),
        in_specs=[pl.BlockSpec((tm, n_p), lambda i: (i, 0)),   # A row slab
                  pl.BlockSpec((n_p, cp), lambda i: (0, 0)),   # Z2 resident
                  pl.BlockSpec((1, cp), lambda i: (0, 0))],    # b2 resident
        out_specs=pl.BlockSpec((tm, cp), lambda i: (i, 0)),
        compiler_params=pltpu.CompilerParams(
            dimension_semantics=("parallel",), vmem_limit_bytes=VMEM_LIMIT),
        cost_estimate=cost,
    )(a_p, z2, b2_p)


# --------------------------------------------------------------------------
# Full forward: out = A_hat @ relu(A_hat @ (X W1) + b1) @ W2 + b2
# --------------------------------------------------------------------------
def gcn_forward_pallas(a_hat, x, w1, b1, w2, b2, *, tile=DEF_TILE,
                       force_tiled=False):
    assert tile % LANE == 0
    n, f = x.shape
    h = w1.shape[1]
    c = w2.shape[1]
    bf = jnp.bfloat16

    fp = _round_up(f, LANE)
    hp = _round_up(h, LANE)
    cp = _round_up(c, LANE)

    # Decide path: fully fused single call when everything fits comfortably
    # in the (generation-dependent) scoped VMEM budget.
    n_p_min = _round_up(n, LANE)
    fused_bytes = (n_p_min * n_p_min * 2 + n_p_min * fp * 2
                   + fp * hp * 2 + hp * cp * 2
                   + 4 * n_p_min * max(hp, cp) * 4      # f32 intermediates
                   + n_p_min * cp * 4)
    use_fused = (not force_tiled) and fused_bytes <= VMEM_LIMIT // 2

    n_p = n_p_min if use_fused else _round_up(n, max(tile, LANE))
    tm = min(tile, n_p)

    # Build padded bf16 operands directly (no full-f32 dense materialization).
    a_p = jnp.pad(a_hat.astype(bf), ((0, n_p - n), (0, n_p - n)))
    x_p = jnp.pad(x.astype(bf), ((0, n_p - n), (0, fp - f)))
    w1_p = jnp.pad(w1.astype(bf), ((0, fp - f), (0, hp - h)))
    b1_p = jnp.pad(b1.astype(jnp.float32), (0, hp - h)).reshape(1, hp)
    w2_p = jnp.pad(w2.astype(bf), ((0, hp - h), (0, cp - c)))
    b2_p = jnp.pad(b2.astype(jnp.float32), (0, cp - c)).reshape(1, cp)

    if use_fused:
        out = _gcn_fused(a_p, x_p, w1_p, b1_p, w2_p, b2_p, jnp.float32)
    else:
        z1 = _transform(x_p, w1_p, tm=tm, out_dtype=bf)               # (Np,Hp)
        z2 = _prop1_fused(a_p, z1, b1_p, w2_p, tm=tm, out_dtype=bf)   # (Np,Cp)
        # TODO(synk): on v5e a bf16 final output (cast to f32 after slicing)
        # halves vst / HBM writeback pressure; kept f32 here for accuracy.
        out = _prop2(a_p, z2, b2_p, tm=tm, out_dtype=jnp.float32)     # (Np,Cp)
    return out[:n, :c]


# --------------------------------------------------------------------------
# Glue: dense symmetrically-normalized adjacency (gcn_norm-style).
# Duplicate edges accumulate (scatter-add), mirroring PyG's edge-weight sum;
# self-loops added as +I.
# --------------------------------------------------------------------------
def normalized_adjacency(edge_index, num_nodes):
    src = edge_index[0]
    dst = edge_index[1]
    a = jnp.zeros((num_nodes, num_nodes), jnp.float32)
    a = a.at[dst, src].add(1.0)                     # message flow src -> dst
    a = a + jnp.eye(num_nodes, dtype=jnp.float32)   # self loops
    deg = a.sum(axis=1)
    dinv = jnp.where(deg > 0, jax.lax.rsqrt(deg), 0.0)
    return a * dinv[:, None] * dinv[None, :]


# Reference that mirrors the kernel's bf16 casting (f32 accumulation).
def gcn_forward_ref(a_hat, x, w1, b1, w2, b2):
    bf, f32 = jnp.bfloat16, jnp.float32
    a = a_hat.astype(bf).astype(f32)
    xb = x.astype(bf).astype(f32)
    w1b = w1.astype(bf).astype(f32)
    w2b = w2.astype(bf).astype(f32)
    z1 = (xb @ w1b).astype(bf).astype(f32)
    h = jnp.maximum(a @ z1 + b1[None, :], 0.0).astype(bf).astype(f32)
    z2 = (h @ w2b).astype(bf).astype(f32)
    return a @ z2 + b2[None, :]


# --------------------------------------------------------------------------
# Main
# --------------------------------------------------------------------------
if __name__ == "__main__":
    # Small synthetic "Cora-like" graph (real Cora: N=2708, F=1433, C=7).
    N = 256
    NUM_FEATURES = 128
    HIDDEN = 16
    NUM_CLASSES = 8
    E = 2048

    key = jax.random.PRNGKey(0)
    k_x, k_e, k_w1, k_b1, k_w2, k_b2 = jax.random.split(key, 6)

    x = jax.random.normal(k_x, (N, NUM_FEATURES), dtype=jnp.float32)
    edge_index = jax.random.randint(k_e, (2, E), 0, N, dtype=jnp.int32)

    def glorot(k, shape):
        limit = jnp.sqrt(6.0 / (shape[0] + shape[1]))
        return jax.random.uniform(k, shape, jnp.float32, -limit, limit)

    w1 = glorot(k_w1, (NUM_FEATURES, HIDDEN))
    b1 = 0.1 * jax.random.normal(k_b1, (HIDDEN,), dtype=jnp.float32)
    w2 = glorot(k_w2, (HIDDEN, NUM_CLASSES))
    b2 = 0.1 * jax.random.normal(k_b2, (NUM_CLASSES,), dtype=jnp.float32)

    a_hat = normalized_adjacency(edge_index, N)
    ref = gcn_forward_ref(a_hat, x, w1, b1, w2, b2)

    # Exercise both paths: fused single-call (auto-selected at this size) and
    # the tiled multi-call path (forced), validating each against the ref.
    out_fused = jax.block_until_ready(
        gcn_forward_pallas(a_hat, x, w1, b1, w2, b2))
    out_tiled = jax.block_until_ready(
        gcn_forward_pallas(a_hat, x, w1, b1, w2, b2, force_tiled=True))

    for name, out in (("fused", out_fused), ("tiled", out_tiled)):
        assert out.shape == (N, NUM_CLASSES)
        err = float(jnp.max(jnp.abs(out - ref)))
        assert jnp.allclose(out, ref, atol=2e-2, rtol=2e-2), (
            "%s path mismatch vs JAX reference: max abs err = %f" % (name, err))

    print("KERNEL_OK")
</pallas_src>

<mosaic_0001>
module attributes {stable_mosaic.version = 11 : i64} {
  func.func @_gcn_fused_kernel(%arg0: memref<256x256xbf16, #tpu.memory_space<vmem>>, %arg1: memref<256x128xbf16, #tpu.memory_space<vmem>>, %arg2: memref<128x128xbf16, #tpu.memory_space<vmem>>, %arg3: memref<1x128xf32, #tpu.memory_space<vmem>>, %arg4: memref<128x128xbf16, #tpu.memory_space<vmem>>, %arg5: memref<1x128xf32, #tpu.memory_space<vmem>>, %arg6: memref<256x128xf32, #tpu.memory_space<vmem>>) attributes {dimension_semantics = [], scalar_prefetch = 0 : i64, scratch_operands = 0 : i64, tpu.core_type = #tpu.core_type<tc>} {
    %c0 = arith.constant 0 : index
    %c0_0 = arith.constant 0 : index
    %0 = vector.load %arg1[%c0, %c0_0] : memref<256x128xbf16, #tpu.memory_space<vmem>>, vector<256x128xbf16>
    %c0_1 = arith.constant 0 : index
    %c0_2 = arith.constant 0 : index
    %1 = vector.load %arg2[%c0_1, %c0_2] : memref<128x128xbf16, #tpu.memory_space<vmem>>, vector<128x128xbf16>
    %cst = arith.constant dense<0.000000e+00> : vector<256x128xf32>
    %2 = tpu.matmul %0, %1, %cst {dimension_numbers = #tpu.dot_dimension_numbers<[1], [0], [0], [1], [0, 0, 1, 1], [], []>} : vector<256x128xbf16>, vector<128x128xbf16>, vector<256x128xf32> -> vector<256x128xf32>
    %3 = arith.truncf %2 : vector<256x128xf32> to vector<256x128xbf16>
    %c0_3 = arith.constant 0 : index
    %c0_4 = arith.constant 0 : index
    %4 = vector.load %arg0[%c0_3, %c0_4] : memref<256x256xbf16, #tpu.memory_space<vmem>>, vector<256x256xbf16>
    %cst_5 = arith.constant dense<0.000000e+00> : vector<256x128xf32>
    %5 = tpu.matmul %4, %3, %cst_5 {dimension_numbers = #tpu.dot_dimension_numbers<[1], [0], [0], [1], [0, 0, 1, 1], [], []>} : vector<256x256xbf16>, vector<256x128xbf16>, vector<256x128xf32> -> vector<256x128xf32>
    %c0_6 = arith.constant 0 : index
    %c0_7 = arith.constant 0 : index
    %6 = vector.load %arg3[%c0_6, %c0_7] : memref<1x128xf32, #tpu.memory_space<vmem>>, vector<1x128xf32>
    %7 = vector.broadcast %6 : vector<1x128xf32> to vector<256x128xf32>
    %8 = arith.addf %5, %7 : vector<256x128xf32>
    %cst_8 = arith.constant 0.000000e+00 : f32
    %9 = vector.broadcast %cst_8 : f32 to vector<256x128xf32>
    %10 = arith.maximumf %8, %9 : vector<256x128xf32>
    %11 = arith.truncf %10 : vector<256x128xf32> to vector<256x128xbf16>
    %c0_9 = arith.constant 0 : index
    %c0_10 = arith.constant 0 : index
    %12 = vector.load %arg4[%c0_9, %c0_10] : memref<128x128xbf16, #tpu.memory_space<vmem>>, vector<128x128xbf16>
    %cst_11 = arith.constant dense<0.000000e+00> : vector<256x128xf32>
    %13 = tpu.matmul %11, %12, %cst_11 {dimension_numbers = #tpu.dot_dimension_numbers<[1], [0], [0], [1], [0, 0, 1, 1], [], []>} : vector<256x128xbf16>, vector<128x128xbf16>, vector<256x128xf32> -> vector<256x128xf32>
    %14 = arith.truncf %13 : vector<256x128xf32> to vector<256x128xbf16>
    %c0_12 = arith.constant 0 : index
    %c0_13 = arith.constant 0 : index
    %15 = vector.load %arg0[%c0_12, %c0_13] : memref<256x256xbf16, #tpu.memory_space<vmem>>, vector<256x256xbf16>
    %cst_14 = arith.constant dense<0.000000e+00> : vector<256x128xf32>
    %16 = tpu.matmul %15, %14, %cst_14 {dimension_numbers = #tpu.dot_dimension_numbers<[1], [0], [0], [1], [0, 0, 1, 1], [], []>} : vector<256x256xbf16>, vector<256x128xbf16>, vector<256x128xf32> -> vector<256x128xf32>
    %c0_15 = arith.constant 0 : index
    %c0_16 = arith.constant 0 : index
    %17 = vector.load %arg5[%c0_15, %c0_16] : memref<1x128xf32, #tpu.memory_space<vmem>>, vector<1x128xf32>
    %18 = vector.broadcast %17 : vector<1x128xf32> to vector<256x128xf32>
    %19 = arith.addf %16, %18 : vector<256x128xf32>
    %c0_17 = arith.constant 0 : index
    %c0_18 = arith.constant 0 : index
    %20 = vector.load %arg6[%c0_17, %c0_18] : memref<256x128xf32, #tpu.memory_space<vmem>>, vector<256x128xf32>
    tpu.vector_store %arg6[%c0_17, %c0_18], %19 {strides = array<i32>} : memref<256x128xf32, #tpu.memory_space<vmem>>, vector<256x128xf32>,
    return
  }
}

</mosaic_0001>

<llo_original>
// kernel: tpu_custom_call.1
$region0: #{tpu_custom_call.1}
  #allocation0 [shape = 'u32[]', space=smem, size = 0x4, offset = 0x4, fixed_abs, tag = 'smem constant byte address 0x4 - core index']
  #allocation1 [shape = 'u32[144,128]{1,0:T(1,128)}', space=vmem, size = 0x12000, scoped, tag = 'internal scratch']
  %s0 = inlined_call_operand.hbm [shape: bf16[256,256], index: 0, kind: input, shape index: {}]
  %s1 = inlined_call_operand.hbm [shape: bf16[256,128], index: 1, kind: input, shape index: {}]
  %s2 = inlined_call_operand.hbm [shape: bf16[128,128], index: 2, kind: input, shape index: {}]
  %s3 = inlined_call_operand.vmem [shape: f32[1,128], index: 3, kind: input, shape index: {}]
  %s4 = inlined_call_operand.hbm [shape: bf16[128,128], index: 4, kind: input, shape index: {}]
  %s5 = inlined_call_operand.vmem [shape: f32[1,128], index: 5, kind: input, shape index: {}]
  %s6 = inlined_call_operand.hbm [shape: f32[256,128], index: 6, kind: output, shape index: {}]
  %s7 = sld [smem:[#allocation0]]
  $region50: #{tpu_custom_call.1} parent=0
    _
  %s9 = ssub.s32 1, %s7
  %s10 = scalar_select 0, %s9, %s7
  $region1: #{tpu_custom_call.1} parent=0
    #allocation2 [shape = 'u8[131072]{0}', space=vmem, size = 0x20000, scoped, tag = 'input window, operand 0, single buffered']
    #allocation3 [shape = 's32[1]{0}', space=sflag, size = 0x4, scoped, tag = 'scoped memory for tpu_custom_call.1']
    #allocation4 [shape = 's32[1]{0}', space=sflag, size = 0x4, scoped, tag = 'scoped memory for tpu_custom_call.1']
    #allocation5 [shape = 'u8[65536]{0}', space=vmem, size = 0x10000, scoped, tag = 'input window, operand 1, single buffered']
    #allocation6 [shape = 's32[1]{0}', space=sflag, size = 0x4, scoped, tag = 'scoped memory for tpu_custom_call.1']
    #allocation7 [shape = 'u8[32768]{0}', space=vmem, size = 0x8000, scoped, tag = 'input window, operand 2, single buffered']
    #allocation8 [shape = 'u8[32768]{0}', space=vmem, size = 0x8000, scoped, tag = 'input window, operand 4, single buffered']
    #allocation9 [shape = 's32[1]{0}', space=sflag, size = 0x4, scoped, tag = 'scoped memory for tpu_custom_call.1']
    #allocation10 [shape = 'u8[131072]{0}', space=vmem, size = 0x20000, scoped, tag = 'output window, operand 0, single buffered']
    %11 = vsyncpa [#allocation3], 0
    %12 = vsyncpa [#allocation6], 0
    %13 = vsyncpa [#allocation9], 0
    %14 = vsyncpa [#allocation4], 0
    // Predicated region
    $region2: #{tpu_custom_call.1} parent=1 // pred_check
      _
    $region3: #{tpu_custom_call.1} parent=1 // pred_check_branch
      %16 = sbr.rel (0) target = $region5
    $region4: #{tpu_custom_call.1} parent=1 // pred_region
      %s18 = ssub.s32 4096, 4096
      %19 = vsyncadd [#allocation3], %s18
      %s20 = sshll.u32 [#allocation2], 4
      %s21 = int_to_ptr.vmem [resolvable:$true] %s20
      %26 = dma.hbm_to_vmem [thread:$0]  %s0, 4096, %s21, [#allocation3], 128, 128, 8
    $region5: #{tpu_custom_call.1} parent=1 // pred_fallthru
      _
    // Predicated region
    $region6: #{tpu_custom_call.1} parent=1 // pred_check
      _
    $region7: #{tpu_custom_call.1} parent=1 // pred_check_branch
      %28 = sbr.rel (0) target = $region9
    $region8: #{tpu_custom_call.1} parent=1 // pred_region
      %s30 = ssub.s32 2048, 2048
      %31 = vsyncadd [#allocation6], %s30
      %s32 = sshll.u32 [#allocation5], 4
      %s33 = int_to_ptr.vmem [resolvable:$true] %s32
      %38 = dma.hbm_to_vmem [thread:$0]  %s1, 2048, %s33, [#allocation6], 64, 64, 4
    $region9: #{tpu_custom_call.1} parent=1 // pred_fallthru
      _
    // Predicated region
    $region10: #{tpu_custom_call.1} parent=1 // pred_check
      _
    $region11: #{tpu_custom_call.1} parent=1 // pred_check_branch
      %40 = sbr.rel (0) target = $region13
    $region12: #{tpu_custom_call.1} parent=1 // pred_region
      %s42 = ssub.s32 1024, 1024
      %43 = vsyncadd [#allocation6], %s42
      %s44 = sshll.u32 [#allocation7], 4
      %s45 = int_to_ptr.vmem [resolvable:$true] %s44
      %50 = dma.hbm_to_vmem [thread:$0]  %s2, 1024, %s45, [#allocation6], 64, 64, 4
    $region13: #{tpu_custom_call.1} parent=1 // pred_fallthru
      _
    // Predicated region
    $region14: #{tpu_custom_call.1} parent=1 // pred_check
      _
    $region15: #{tpu_custom_call.1} parent=1 // pred_check_branch
      %52 = sbr.rel (0) target = $region17
    $region16: #{tpu_custom_call.1} parent=1 // pred_region
      _
    $region17: #{tpu_custom_call.1} parent=1 // pred_fallthru
      _
    // Predicated region
    $region18: #{tpu_custom_call.1} parent=1 // pred_check
      _
    $region19: #{tpu_custom_call.1} parent=1 // pred_check_branch
      %54 = sbr.rel (0) target = $region21
    $region20: #{tpu_custom_call.1} parent=1 // pred_region
      %s56 = ssub.s32 1024, 1024
      %57 = vsyncadd [#allocation9], %s56
      %s58 = sshll.u32 [#allocation8], 4
      %s59 = int_to_ptr.vmem [resolvable:$true] %s58
      %64 = dma.hbm_to_vmem [thread:$0]  %s4, 1024, %s59, [#allocation9], 64, 64, 4
    $region21: #{tpu_custom_call.1} parent=1 // pred_fallthru
      _
    // Predicated region
    $region22: #{tpu_custom_call.1} parent=1 // pred_check
      _
    $region23: #{tpu_custom_call.1} parent=1 // pred_check_branch
      %66 = sbr.rel (0) target = $region25
    $region24: #{tpu_custom_call.1} parent=1 // pred_region
      _
    $region25: #{tpu_custom_call.1} parent=1 // pred_fallthru
      _
    // Predicated region
    $region26: #{tpu_custom_call.1} parent=1 // pred_check
      _
    $region27: #{tpu_custom_call.1} parent=1 // pred_check_branch
      %68 = sbr.rel (0) target = $region29
    $region28: #{tpu_custom_call.1} parent=1 // pred_region
      %69 = dma.done [#allocation3], 4096
    $region29: #{tpu_custom_call.1} parent=1 // pred_fallthru
      _
    // Predicated region
    $region30: #{tpu_custom_call.1} parent=1 // pred_check
      _
    $region31: #{tpu_custom_call.1} parent=1 // pred_check_branch
      %71 = sbr.rel (0) target = $region33
    $region32: #{tpu_custom_call.1} parent=1 // pred_region
      %72 = dma.done [#allocation6], 2048
    $region33: #{tpu_custom_call.1} parent=1 // pred_fallthru
      _
    // Predicated region
    $region34: #{tpu_custom_call.1} parent=1 // pred_check
      _
    $region35: #{tpu_custom_call.1} parent=1 // pred_check_branch
      %74 = sbr.rel (0) target = $region37
    $region36: #{tpu_custom_call.1} parent=1 // pred_region
      %75 = dma.done [#allocation6], 1024
    $region37: #{tpu_custom_call.1} parent=1 // pred_fallthru
      _
    // Predicated region
    $region38: #{tpu_custom_call.1} parent=1 // pred_check
      _
    $region39: #{tpu_custom_call.1} parent=1 // pred_check_branch
      %77 = sbr.rel (0) target = $region41
    $region40: #{tpu_custom_call.1} parent=1 // pred_region
      %78 = dma.done [#allocation9], 1024
    $region41: #{tpu_custom_call.1} parent=1 // pred_fallthru
      _
    %v80 = vld [vmem:[#allocation5] sm:$0xf]
    %v81 = vld [vmem:[#allocation5 + $0x4] sm:$0xf]
    %v82 = vld [vmem:[#allocation5 + $0x8] sm:$0xf]
    %v83 = vld [vmem:[#allocation5 + $0xc] sm:$0xf]
    %v84 = vld [vmem:[#allocation5 + $0x10] sm:$0xf]
    %v85 = vld [vmem:[#allocation5 + $0x14] sm:$0xf]
    %v86 = vld [vmem:[#allocation5 + $0x18] sm:$0xf]
    %v87 = vld [vmem:[#allocation5 + $0x1c] sm:$0xf]
    %v88 = vld [vmem:[#allocation5 + $0x20] sm:$0xf]
    %v89 = vld [vmem:[#allocation5 + $0x24] sm:$0xf]
    %v90 = vld [vmem:[#allocation5 + $0x28] sm:$0xf]
    %v91 = vld [vmem:[#allocation5 + $0x2c] sm:$0xf]
    %v92 = vld [vmem:[#allocation5 + $0x30] sm:$0xf]
    %v93 = vld [vmem:[#allocation5 + $0x34] sm:$0xf]
    %v94 = vld [vmem:[#allocation5 + $0x38] sm:$0xf]
    %v95 = vld [vmem:[#allocation5 + $0x3c] sm:$0xf]
    %v96 = vld [vmem:[#allocation5 + $0x40] sm:$0xf]
    %v97 = vld [vmem:[#allocation5 + $0x44] sm:$0xf]
    %v98 = vld [vmem:[#allocation5 + $0x48] sm:$0xf]
    %v99 = vld [vmem:[#allocation5 + $0x4c] sm:$0xf]
    %v100 = vld [vmem:[#allocation5 + $0x50] sm:$0xf]
    %v101 = vld [vmem:[#allocation5 + $0x54] sm:$0xf]
    %v102 = vld [vmem:[#allocation5 + $0x58] sm:$0xf]
    %v103 = vld [vmem:[#allocation5 + $0x5c] sm:$0xf]
    %v104 = vld [vmem:[#allocation5 + $0x60] sm:$0xf]
    %v105 = vld [vmem:[#allocation5 + $0x64] sm:$0xf]
    %v106 = vld [vmem:[#allocation5 + $0x68] sm:$0xf]
    %v107 = vld [vmem:[#allocation5 + $0x6c] sm:$0xf]
    %v108 = vld [vmem:[#allocation5 + $0x70] sm:$0xf]
    %v109 = vld [vmem:[#allocation5 + $0x74] sm:$0xf]
    %v110 = vld [vmem:[#allocation5 + $0x78] sm:$0xf]
    %v111 = vld [vmem:[#allocation5 + $0x7c] sm:$0xf]
    %v112 = vld [vmem:[#allocation7] sm:$0xf]
    %v113 = vld [vmem:[#allocation7 + $0x4] sm:$0xf]
    %v114 = vld [vmem:[#allocation7 + $0x8] sm:$0xf]
    %v115 = vld [vmem:[#allocation7 + $0xc] sm:$0xf]
    %v116 = vld [vmem:[#allocation7 + $0x10] sm:$0xf]
    %v117 = vld [vmem:[#allocation7 + $0x14] sm:$0xf]
    %v118 = vld [vmem:[#allocation7 + $0x18] sm:$0xf]
    %v119 = vld [vmem:[#allocation7 + $0x1c] sm:$0xf]
    %v120 = vld [vmem:[#allocation7 + $0x20] sm:$0xf]
    %v121 = vld [vmem:[#allocation7 + $0x24] sm:$0xf]
    %v122 = vld [vmem:[#allocation7 + $0x28] sm:$0xf]
    %v123 = vld [vmem:[#allocation7 + $0x2c] sm:$0xf]
    %v124 = vld [vmem:[#allocation7 + $0x30] sm:$0xf]
    %v125 = vld [vmem:[#allocation7 + $0x34] sm:$0xf]
    %v126 = vld [vmem:[#allocation7 + $0x38] sm:$0xf]
    %v127 = vld [vmem:[#allocation7 + $0x3c] sm:$0xf]
    %v160 = vunpack.c.l.b16 %v80
    %v161 = vunpack.c.l.b16 %v81
    %v162 = vunpack.c.l.b16 %v82
    %v163 = vunpack.c.l.b16 %v83
    %v164 = vunpack.c.l.b16 %v84
    %v165 = vunpack.c.l.b16 %v85
    %v166 = vunpack.c.l.b16 %v86
    %v167 = vunpack.c.l.b16 %v87
    %v168 = vunpack.c.l.b16 %v88
    %v169 = vunpack.c.l.b16 %v89
    %v170 = vunpack.c.l.b16 %v90
    %v171 = vunpack.c.l.b16 %v91
    %v172 = vunpack.c.l.b16 %v92
    %v173 = vunpack.c.l.b16 %v93
    %v174 = vunpack.c.l.b16 %v94
    %v175 = vunpack.c.l.b16 %v95
    %v176 = vunpack.c.l.b16 %v96
    %v177 = vunpack.c.l.b16 %v97
    %v178 = vunpack.c.l.b16 %v98
    %v179 = vunpack.c.l.b16 %v99
    %v180 = vunpack.c.l.b16 %v100
    %v181 = vunpack.c.l.b16 %v101
    %v182 = vunpack.c.l.b16 %v102
    %v183 = vunpack.c.l.b16 %v103
    %v184 = vunpack.c.l.b16 %v104
    %v185 = vunpack.c.l.b16 %v105
    %v186 = vunpack.c.l.b16 %v106
    %v187 = vunpack.c.l.b16 %v107
    %v188 = vunpack.c.l.b16 %v108
    %v189 = vunpack.c.l.b16 %v109
    %v190 = vunpack.c.l.b16 %v110
    %v191 = vunpack.c.l.b16 %v111
    %v192 = vpack.c.b16 %v161, %v160
    %v193 = vpack.c.b16 %v163, %v162
    %v194 = vpack.c.b16 %v165, %v164
    %v195 = vpack.c.b16 %v167, %v166
    %v196 = vpack.c.b16 %v169, %v168
    %v197 = vpack.c.b16 %v171, %v170
    %v198 = vpack.c.b16 %v173, %v172
    %v199 = vpack.c.b16 %v175, %v174
    %v200 = vpack.c.b16 %v177, %v176
    %v201 = vpack.c.b16 %v179, %v178
    %v202 = vpack.c.b16 %v181, %v180
    %v203 = vpack.c.b16 %v183, %v182
    %v204 = vpack.c.b16 %v185, %v184
    %v205 = vpack.c.b16 %v187, %v186
    %v206 = vpack.c.b16 %v189, %v188
    %v207 = vpack.c.b16 %v191, %v190
    %v240 = vunpack.c.l.b16 %v112
    %v241 = vunpack.c.l.b16 %v113
    %v242 = vunpack.c.l.b16 %v114
    %v243 = vunpack.c.l.b16 %v115
    %v244 = vunpack.c.l.b16 %v116
    %v245 = vunpack.c.l.b16 %v117
    %v246 = vunpack.c.l.b16 %v118
    %v247 = vunpack.c.l.b16 %v119
    %v248 = vunpack.c.l.b16 %v120
    %v249 = vunpack.c.l.b16 %v121
    %v250 = vunpack.c.l.b16 %v122
    %v251 = vunpack.c.l.b16 %v123
    %v252 = vunpack.c.l.b16 %v124
    %v253 = vunpack.c.l.b16 %v125
    %v254 = vunpack.c.l.b16 %v126
    %v255 = vunpack.c.l.b16 %v127
    %v256 = vpack.c.b16 %v241, %v240
    %v257 = vpack.c.b16 %v243, %v242
    %v258 = vpack.c.b16 %v245, %v244
    %v259 = vpack.c.b16 %v247, %v246
    %v260 = vpack.c.b16 %v249, %v248
    %v261 = vpack.c.b16 %v251, %v250
    %v262 = vpack.c.b16 %v253, %v252
    %v263 = vpack.c.b16 %v255, %v254
    %272 = vmatprep.subr.bf16.mxu0 0
    %273 = vmatpush1.bf16.msra.mxu0 %v256
    %274 = vmatprep.subr.bf16.mxu0 0
    %275 = vmatpush1.bf16.msra.mxu0 %v257
    %276 = vmatprep.subr.bf16.mxu0 0
    %277 = vmatpush1.bf16.msra.mxu0 %v258
    %278 = vmatprep.subr.bf16.mxu0 0
    %279 = vmatpush1.bf16.msra.mxu0 %v259
    %280 = vmatprep.subr.bf16.mxu0 0
    %281 = vmatpush1.bf16.msra.mxu0 %v260
    %282 = vmatprep.subr.bf16.mxu0 0
    %283 = vmatpush1.bf16.msra.mxu0 %v261
    %284 = vmatprep.subr.bf16.mxu0 0
    %285 = vmatpush1.bf16.msra.mxu0 %v262
    %286 = vmatprep.subr.bf16.mxu0 0
    %287 = vmatpush1.bf16.msra.mxu0 %v263
    %288 = vmatprep.subr.bf16.mxu0 0
    %289 = vmatpush1.bf16.msra.mxu0 0
    %290 = vmatprep.subr.bf16.mxu0 0
    %291 = vmatpush1.bf16.msra.mxu0 0
    %292 = vmatprep.subr.bf16.mxu0 0
    %293 = vmatpush1.bf16.msra.mxu0 0
    %294 = vmatprep.subr.bf16.mxu0 0
    %295 = vmatpush1.bf16.msra.mxu0 0
    %296 = vmatprep.subr.bf16.mxu0 0
    %297 = vmatpush1.bf16.msra.mxu0 0
    %298 = vmatprep.subr.bf16.mxu0 0
    %299 = vmatpush1.bf16.msra.mxu0 0
    %300 = vmatprep.subr.bf16.mxu0 0
    %301 = vmatpush1.bf16.msra.mxu0 0
    %302 = vmatprep.subr.bf16.mxu0 0
    %303 = vmatpush1.bf16.msra.mxu0 0
    %304 = vmatprep.mubr.bf16.mxu0 0
    %305 = vmatmul.mubr.bf16.gmra.mrb[0].mxu0 %v192
    %v306 = vpop.f32.mrb[0].mxu0
    %v307 = vadd.f32 0.0, %v306
    %v308 = vpop.f32.mrb[0].mxu0
    %v309 = vpop.f32.mrb[0].mxu0
    %v310 = vadd.f32 0.0, %v309
    %v311 = vpop.f32.mrb[0].mxu0
    %312 = vmatprep.mubr.bf16.mxu0 0
    %313 = vmatmul.mubr.bf16.gmra.mrb[0].mxu0 %v193
    %v314 = vpop.f32.mrb[0].mxu0
    %v315 = vadd.f32 0.0, %v314
    %v316 = vpop.f32.mrb[0].mxu0
    %v317 = vpop.f32.mrb[0].mxu0
    %v318 = vadd.f32 0.0, %v317
    %v319 = vpop.f32.mrb[0].mxu0
    %320 = vmatprep.mubr.bf16.mxu0 0
    %321 = vmatmul.mubr.bf16.gmra.mrb[0].mxu0 %v194
    %v322 = vpop.f32.mrb[0].mxu0
    %v323 = vadd.f32 0.0, %v322
    %v324 = vpop.f32.mrb[0].mxu0
    %v325 = vpop.f32.mrb[0].mxu0
    %v326 = vadd.f32 0.0, %v325
    %v327 = vpop.f32.mrb[0].mxu0
    %328 = vmatprep.mubr.bf16.mxu0 0
    %329 = vmatmul.mubr.bf16.gmra.mrb[0].mxu0 %v195
    %v330 = vpop.f32.mrb[0].mxu0
    %v331 = vadd.f32 0.0, %v330
    %v332 = vpop.f32.mrb[0].mxu0
    %v333 = vpop.f32.mrb[0].mxu0
    %v334 = vadd.f32 0.0, %v333
    %v335 = vpop.f32.mrb[0].mxu0
    %336 = vmatprep.mubr.bf16.mxu0 0
    %337 = vmatmul.mubr.bf16.gmra.mrb[0].mxu0 %v196
    %v338 = vpop.f32.mrb[0].mxu0
    %v339 = vadd.f32 0.0, %v338
    %v340 = vpop.f32.mrb[0].mxu0
    %v341 = vpop.f32.mrb[0].mxu0
    %v342 = vadd.f32 0.0, %v341
    %v343 = vpop.f32.mrb[0].mxu0
    %344 = vmatprep.mubr.bf16.mxu0 0
    %345 = vmatmul.mubr.bf16.gmra.mrb[0].mxu0 %v197
    %v346 = vpop.f32.mrb[0].mxu0
    %v347 = vadd.f32 0.0, %v346
    %v348 = vpop.f32.mrb[0].mxu0
    %v349 = vpop.f32.mrb[0].mxu0
    %v350 = vadd.f32 0.0, %v349
    %v351 = vpop.f32.mrb[0].mxu0
    %352 = vmatprep.mubr.bf16.mxu0 0
    %353 = vmatmul.mubr.bf16.gmra.mrb[0].mxu0 %v198
    %v354 = vpop.f32.mrb[0].mxu0
    %v355 = vadd.f32 0.0, %v354
    %v356 = vpop.f32.mrb[0].mxu0
    %v357 = vpop.f32.mrb[0].mxu0
    %v358 = vadd.f32 0.0, %v357
    %v359 = vpop.f32.mrb[0].mxu0
    %360 = vmatprep.mubr.bf16.mxu0 0
    %361 = vmatmul.mubr.bf16.gmra.mrb[0].mxu0 %v199
    %v362 = vpop.f32.mrb[0].mxu0
    %v363 = vadd.f32 0.0, %v362
    %v364 = vpop.f32.mrb[0].mxu0
    %v365 = vpop.f32.mrb[0].mxu0
    %v366 = vadd.f32 0.0, %v365
    %v367 = vpop.f32.mrb[0].mxu0
    %368 = vmatprep.mubr.bf16.mxu0 0
    %369 = vmatmul.mubr.bf16.gmra.mrb[0].mxu0 %v200
    %v370 = vpop.f32.mrb[0].mxu0
    %v371 = vadd.f32 0.0, %v370
    %v372 = vpop.f32.mrb[0].mxu0
    %v373 = vpop.f32.mrb[0].mxu0
    %v374 = vadd.f32 0.0, %v373
    %v375 = vpop.f32.mrb[0].mxu0
    %376 = vmatprep.mubr.bf16.mxu0 0
    %377 = vmatmul.mubr.bf16.gmra.mrb[0].mxu0 %v201
    %v378 = vpop.f32.mrb[0].mxu0
    %v379 = vadd.f32 0.0, %v378
    %v380 = vpop.f32.mrb[0].mxu0
    %v381 = vpop.f32.mrb[0].mxu0
    %v382 = vadd.f32 0.0, %v381
    %v383 = vpop.f32.mrb[0].mxu0
    %384 = vmatprep.mubr.bf16.mxu0 0
    %385 = vmatmul.mubr.bf16.gmra.mrb[0].mxu0 %v202
    %v386 = vpop.f32.mrb[0].mxu0
    %v387 = vadd.f32 0.0, %v386
    %v388 = vpop.f32.mrb[0].mxu0
    %v389 = vpop.f32.mrb[0].mxu0
    %v390 = vadd.f32 0.0, %v389
    %v391 = vpop.f32.mrb[0].mxu0
    %392 = vmatprep.mubr.bf16.mxu0 0
    %393 = vmatmul.mubr.bf16.gmra.mrb[0].mxu0 %v203
    %v394 = vpop.f32.mrb[0].mxu0
    %v395 = vadd.f32 0.0, %v394
    %v396 = vpop.f32.mrb[0].mxu0
    %v397 = vpop.f32.mrb[0].mxu0
    %v398 = vadd.f32 0.0, %v397
    %v399 = vpop.f32.mrb[0].mxu0
    %400 = vmatprep.mubr.bf16.mxu0 0
    %401 = vmatmul.mubr.bf16.gmra.mrb[0].mxu0 %v204
    %v402 = vpop.f32.mrb[0].mxu0
    %v403 = vadd.f32 0.0, %v402
    %v404 = vpop.f32.mrb[0].mxu0
    %v405 = vpop.f32.mrb[0].mxu0
    %v406 = vadd.f32 0.0, %v405
    %v407 = vpop.f32.mrb[0].mxu0
    %408 = vmatprep.mubr.bf16.mxu0 0
    %409 = vmatmul.mubr.bf16.gmra.mrb[0].mxu0 %v205
    %v410 = vpop.f32.mrb[0].mxu0
    %v411 = vadd.f32 0.0, %v410
    %v412 = vpop.f32.mrb[0].mxu0
    %v413 = vpop.f32.mrb[0].mxu0
    %v414 = vadd.f32 0.0, %v413
    %v415 = vpop.f32.mrb[0].mxu0
    %416 = vmatprep.mubr.bf16.mxu0 0
    %417 = vmatmul.mubr.bf16.gmra.mrb[0].mxu0 %v206
    %v418 = vpop.f32.mrb[0].mxu0
    %v419 = vadd.f32 0.0, %v418
    %v420 = vpop.f32.mrb[0].mxu0
    %v421 = vpop.f32.mrb[0].mxu0
    %v422 = vadd.f32 0.0, %v421
    %v423 = vpop.f32.mrb[0].mxu0
    %424 = vmatprep.mubr.bf16.mxu0 0
    %425 = vmatmul.mubr.bf16.gmra.mrb[0].mxu0 %v207
    %v426 = vpop.f32.mrb[0].mxu0
    %v427 = vadd.f32 0.0, %v426
    %v428 = vpop.f32.mrb[0].mxu0
    %v429 = vpop.f32.mrb[0].mxu0
    %v430 = vadd.f32 0.0, %v429
    %v431 = vpop.f32.mrb[0].mxu0
    %432 = vdwg.mxu0
    %v433 = vpack.c.bf16 %v310, %v307
    %v434 = vpack.c.bf16 %v318, %v315
    %v435 = vpack.c.bf16 %v326, %v323
    %v436 = vpack.c.bf16 %v334, %v331
    %v437 = vpack.c.bf16 %v342, %v339
    %v438 = vpack.c.bf16 %v350, %v347
    %v439 = vpack.c.bf16 %v358, %v355
    %v440 = vpack.c.bf16 %v366, %v363
    %v441 = vpack.c.bf16 %v374, %v371
    %v442 = vpack.c.bf16 %v382, %v379
    %v443 = vpack.c.bf16 %v390, %v387
    %v444 = vpack.c.bf16 %v398, %v395
    %v445 = vpack.c.bf16 %v406, %v403
    %v446 = vpack.c.bf16 %v414, %v411
    %v447 = vpack.c.bf16 %v422, %v419
    %v448 = vpack.c.bf16 %v430, %v427
    %v449 = vld [vmem:[#allocation2] sm:$0xff]
    %v450 = vld [vmem:[#allocation2 + $0x8] sm:$0xff]
    %v451 = vld [vmem:[#allocation2 + $0x10] sm:$0xff]
    %v452 = vld [vmem:[#allocation2 + $0x18] sm:$0xff]
    %v453 = vld [vmem:[#allocation2 + $0x20] sm:$0xff]
    %v454 = vld [vmem:[#allocation2 + $0x28] sm:$0xff]
    %v455 = vld [vmem:[#allocation2 + $0x30] sm:$0xff]
    %v456 = vld [vmem:[#allocation2 + $0x38] sm:$0xff]
    %v457 = vld [vmem:[#allocation2 + $0x40] sm:$0xff]
    %v458 = vld [vmem:[#allocation2 + $0x48] sm:$0xff]
    %v459 = vld [vmem:[#allocation2 + $0x50] sm:$0xff]
    %v460 = vld [vmem:[#allocation2 + $0x58] sm:$0xff]
    %v461 = vld [vmem:[#allocation2 + $0x60] sm:$0xff]
    %v462 = vld [vmem:[#allocation2 + $0x68] sm:$0xff]
    %v463 = vld [vmem:[#allocation2 + $0x70] sm:$0xff]
    %v464 = vld [vmem:[#allocation2 + $0x78] sm:$0xff]
    %v465 = vld [vmem:[#allocation2 + $0x80] sm:$0xff]
    %v466 = vld [vmem:[#allocation2 + $0x88] sm:$0xff]
    %v467 = vld [vmem:[#allocation2 + $0x90] sm:$0xff]
    %v468 = vld [vmem:[#allocation2 + $0x98] sm:$0xff]
    %v469 = vld [vmem:[#allocation2 + $0xa0] sm:$0xff]
    %v470 = vld [vmem:[#allocation2 + $0xa8] sm:$0xff]
    %v471 = vld [vmem:[#allocation2 + $0xb0] sm:$0xff]
    %v472 = vld [vmem:[#allocation2 + $0xb8] sm:$0xff]
    %v473 = vld [vmem:[#allocation2 + $0xc0] sm:$0xff]
    %v474 = vld [vmem:[#allocation2 + $0xc8] sm:$0xff]
    %v475 = vld [vmem:[#allocation2 + $0xd0] sm:$0xff]
    %v476 = vld [vmem:[#allocation2 + $0xd8] sm:$0xff]
    %v477 = vld [vmem:[#allocation2 + $0xe0] sm:$0xff]
    %v478 = vld [vmem:[#allocation2 + $0xe8] sm:$0xff]
    %v479 = vld [vmem:[#allocation2 + $0xf0] sm:$0xff]
    %v480 = vld [vmem:[#allocation2 + $0xf8] sm:$0xff]
    %v481 = vld [vmem:[%s3] sm:$0x1]
    %v483 = vlaneseq
    %v484 = vshrl.u32 %v483, 7
    %v485 = vsub.s32 0, %v484
    %v486 = vrot.slane %v481, %v485
    %v520 = vunpack.c.l.b16 %v449
    %v521 = vunpack.c.h.b16 %v449
    %v522 = vunpack.c.l.b16 %v450
    %v523 = vunpack.c.h.b16 %v450
    %v524 = vunpack.c.l.b16 %v451
    %v525 = vunpack.c.h.b16 %v451
    %v526 = vunpack.c.l.b16 %v452
    %v527 = vunpack.c.h.b16 %v452
    %v528 = vunpack.c.l.b16 %v453
    %v529 = vunpack.c.h.b16 %v453
    %v530 = vunpack.c.l.b16 %v454
    %v531 = vunpack.c.h.b16 %v454
    %v532 = vunpack.c.l.b16 %v455
    %v533 = vunpack.c.h.b16 %v455
    %v534 = vunpack.c.l.b16 %v456
    %v535 = vunpack.c.h.b16 %v456
    %v536 = vunpack.c.l.b16 %v457
    %v537 = vunpack.c.h.b16 %v457
    %v538 = vunpack.c.l.b16 %v458
    %v539 = vunpack.c.h.b16 %v458
    %v540 = vunpack.c.l.b16 %v459
    %v541 = vunpack.c.h.b16 %v459
    %v542 = vunpack.c.l.b16 %v460
    %v543 = vunpack.c.h.b16 %v460
    %v544 = vunpack.c.l.b16 %v461
    %v545 = vunpack.c.h.b16 %v461
    %v546 = vunpack.c.l.b16 %v462
    %v547 = vunpack.c.h.b16 %v462
    %v548 = vunpack.c.l.b16 %v463
    %v549 = vunpack.c.h.b16 %v463
    %v550 = vunpack.c.l.b16 %v464
    %v551 = vunpack.c.h.b16 %v464
    %v552 = vunpack.c.l.b16 %v465
    %v553 = vunpack.c.h.b16 %v465
    %v554 = vunpack.c.l.b16 %v466
    %v555 = vunpack.c.h.b16 %v466
    %v556 = vunpack.c.l.b16 %v467
    %v557 = vunpack.c.h.b16 %v467
    %v558 = vunpack.c.l.b16 %v468
    %v559 = vunpack.c.h.b16 %v468
    %v560 = vunpack.c.l.b16 %v469
    %v561 = vunpack.c.h.b16 %v469
    %v562 = vunpack.c.l.b16 %v470
    %v563 = vunpack.c.h.b16 %v470
    %v564 = vunpack.c.l.b16 %v471
    %v565 = vunpack.c.h.b16 %v471
    %v566 = vunpack.c.l.b16 %v472
    %v567 = vunpack.c.h.b16 %v472
    %v568 = vunpack.c.l.b16 %v473
    %v569 = vunpack.c.h.b16 %v473
    %v570 = vunpack.c.l.b16 %v474
    %v571 = vunpack.c.h.b16 %v474
    %v572 = vunpack.c.l.b16 %v475
    %v573 = vunpack.c.h.b16 %v475
    %v574 = vunpack.c.l.b16 %v476
    %v575 = vunpack.c.h.b16 %v476
    %v576 = vunpack.c.l.b16 %v477
    %v577 = vunpack.c.h.b16 %v477
    %v578 = vunpack.c.l.b16 %v478
    %v579 = vunpack.c.h.b16 %v478
    %v580 = vunpack.c.l.b16 %v479
    %v581 = vunpack.c.h.b16 %v479
    %v582 = vunpack.c.l.b16 %v480
    %v583 = vunpack.c.h.b16 %v480
    %v584 = vpack.c.b16 %v522, %v520
    %v585 = vpack.c.b16 %v523, %v521
    %v586 = vpack.c.b16 %v526, %v524
    %v587 = vpack.c.b16 %v527, %v525
    %v588 = vpack.c.b16 %v530, %v528
    %v589 = vpack.c.b16 %v531, %v529
    %v590 = vpack.c.b16 %v534, %v532
    %v591 = vpack.c.b16 %v535, %v533
    %v592 = vpack.c.b16 %v538, %v536
    %v593 = vpack.c.b16 %v539, %v537
    %v594 = vpack.c.b16 %v542, %v540
    %v595 = vpack.c.b16 %v543, %v541
    %v596 = vpack.c.b16 %v546, %v544
    %v597 = vpack.c.b16 %v547, %v545
    %v598 = vpack.c.b16 %v550, %v548
    %v599 = vpack.c.b16 %v551, %v549
    %v600 = vpack.c.b16 %v554, %v552
    %v601 = vpack.c.b16 %v555, %v553
    %v602 = vpack.c.b16 %v558, %v556
    %v603 = vpack.c.b16 %v559, %v557
    %v604 = vpack.c.b16 %v562, %v560
    %v605 = vpack.c.b16 %v563, %v561
    %v606 = vpack.c.b16 %v566, %v564
    %v607 = vpack.c.b16 %v567, %v565
    %v608 = vpack.c.b16 %v570, %v568
    %v609 = vpack.c.b16 %v571, %v569
    %v610 = vpack.c.b16 %v574, %v572
    %v611 = vpack.c.b16 %v575, %v573
    %v612 = vpack.c.b16 %v578, %v576
    %v613 = vpack.c.b16 %v579, %v577
    %v614 = vpack.c.b16 %v582, %v580
    %v615 = vpack.c.b16 %v583, %v581
    %648 = vmatprep.subr.bf16.mxu0 0
    %649 = vmatpush1.bf16.msra.mxu0 %v433
    %650 = vmatprep.subr.bf16.mxu0 0
    %651 = vmatpush1.bf16.msra.mxu0 %v434
    %652 = vmatprep.subr.bf16.mxu0 0
    %653 = vmatpush1.bf16.msra.mxu0 %v435
    %654 = vmatprep.subr.bf16.mxu0 0
    %655 = vmatpush1.bf16.msra.mxu0 %v436
    %656 = vmatprep.subr.bf16.mxu0 0
    %657 = vmatpush1.bf16.msra.mxu0 %v437
    %658 = vmatprep.subr.bf16.mxu0 0
    %659 = vmatpush1.bf16.msra.mxu0 %v438
    %660 = vmatprep.subr.bf16.mxu0 0
    %661 = vmatpush1.bf16.msra.mxu0 %v439
    %662 = vmatprep.subr.bf16.mxu0 0
    %663 = vmatpush1.bf16.msra.mxu0 %v440
    %664 = vmatprep.subr.bf16.mxu0 0
    %665 = vmatpush1.bf16.msra.mxu0 %v441
    %666 = vmatprep.subr.bf16.mxu0 0
    %667 = vmatpush1.bf16.msra.mxu0 %v442
    %668 = vmatprep.subr.bf16.mxu0 0
    %669 = vmatpush1.bf16.msra.mxu0 %v443
    %670 = vmatprep.subr.bf16.mxu0 0
    %671 = vmatpush1.bf16.msra.mxu0 %v444
    %672 = vmatprep.subr.bf16.mxu0 0
    %673 = vmatpush1.bf16.msra.mxu0 %v445
    %674 = vmatprep.subr.bf16.mxu0 0
    %675 = vmatpush1.bf16.msra.mxu0 %v446
    %676 = vmatprep.subr.bf16.mxu0 0
    %677 = vmatpush1.bf16.msra.mxu0 %v447
    %678 = vmatprep.subr.bf16.mxu0 0
    %679 = vmatpush1.bf16.msra.mxu0 %v448
    %680 = vmatprep.mubr.bf16.mxu0 %v585
    %681 = vmatmul.mubr.bf16.gmra.mrb[0].mxu0 %v584
    %v682 = vpop.f32.mrb[0].mxu0
    %v683 = vadd.f32 %v486, %v682
    %v684 = vpop.f32.mrb[0].mxu0
    %v685 = vpop.f32.mrb[0].mxu0
    %v686 = vadd.f32 %v486, %v685
    %v687 = vpop.f32.mrb[0].mxu0
    %688 = vmatprep.mubr.bf16.mxu0 %v587
    %689 = vmatmul.mubr.bf16.gmra.mrb[0].mxu0 %v586
    %v690 = vpop.f32.mrb[0].mxu0
    %v691 = vadd.f32 %v486, %v690
    %v692 = vpop.f32.mrb[0].mxu0
    %v693 = vpop.f32.mrb[0].mxu0
    %v694 = vadd.f32 %v486, %v693
    %v695 = vpop.f32.mrb[0].mxu0
    %696 = vmatprep.mubr.bf16.mxu0 %v589
    %697 = vmatmul.mubr.bf16.gmra.mrb[0].mxu0 %v588
    %v698 = vpop.f32.mrb[0].mxu0
    %v699 = vadd.f32 %v486, %v698
    %v700 = vpop.f32.mrb[0].mxu0
    %v701 = vpop.f32.mrb[0].mxu0
    %v702 = vadd.f32 %v486, %v701
    %v703 = vpop.f32.mrb[0].mxu0
    %704 = vmatprep.mubr.bf16.mxu0 %v591
    %705 = vmatmul.mubr.bf16.gmra.mrb[0].mxu0 %v590
    %v706 = vpop.f32.mrb[0].mxu0
    %v707 = vadd.f32 %v486, %v706
    %v708 = vpop.f32.mrb[0].mxu0
    %v709 = vpop.f32.mrb[0].mxu0
    %v710 = vadd.f32 %v486, %v709
    %v711 = vpop.f32.mrb[0].mxu0
    %712 = vmatprep.mubr.bf16.mxu0 %v593
    %713 = vmatmul.mubr.bf16.gmra.mrb[0].mxu0 %v592
    %v714 = vpop.f32.mrb[0].mxu0
    %v715 = vadd.f32 %v486, %v714
    %v716 = vpop.f32.mrb[0].mxu0
    %v717 = vpop.f32.mrb[0].mxu0
    %v718 = vadd.f32 %v486, %v717
    %v719 = vpop.f32.mrb[0].mxu0
    %720 = vmatprep.mubr.bf16.mxu0 %v595
    %721 = vmatmul.mubr.bf16.gmra.mrb[0].mxu0 %v594
    %v722 = vpop.f32.mrb[0].mxu0
    %v723 = vadd.f32 %v486, %v722
    %v724 = vpop.f32.mrb[0].mxu0
    %v725 = vpop.f32.mrb[0].mxu0
    %v726 = vadd.f32 %v486, %v725
    %v727 = vpop.f32.mrb[0].mxu0
    %728 = vmatprep.mubr.bf16.mxu0 %v597
    %729 = vmatmul.mubr.bf16.gmra.mrb[0].mxu0 %v596
    %v730 = vpop.f32.mrb[0].mxu0
    %v731 = vadd.f32 %v486, %v730
    %v732 = vpop.f32.mrb[0].mxu0
    %v733 = vpop.f32.mrb[0].mxu0
    %v734 = vadd.f32 %v486, %v733
    %v735 = vpop.f32.mrb[0].mxu0
    %736 = vmatprep.mubr.bf16.mxu0 %v599
    %737 = vmatmul.mubr.bf16.gmra.mrb[0].mxu0 %v598
    %v738 = vpop.f32.mrb[0].mxu0
    %v739 = vadd.f32 %v486, %v738
    %v740 = vpop.f32.mrb[0].mxu0
    %v741 = vpop.f32.mrb[0].mxu0
    %v742 = vadd.f32 %v486, %v741
    %v743 = vpop.f32.mrb[0].mxu0
    %744 = vmatprep.mubr.bf16.mxu0 %v601
    %745 = vmatmul.mubr.bf16.gmra.mrb[0].mxu0 %v600
    %v746 = vpop.f32.mrb[0].mxu0
    %v747 = vadd.f32 %v486, %v746
    %v748 = vpop.f32.mrb[0].mxu0
    %v749 = vpop.f32.mrb[0].mxu0
    %v750 = vadd.f32 %v486, %v749
    %v751 = vpop.f32.mrb[0].mxu0
    %752 = vmatprep.mubr.bf16.mxu0 %v603
    %753 = vmatmul.mubr.bf16.gmra.mrb[0].mxu0 %v602
    %v754 = vpop.f32.mrb[0].mxu0
    %v755 = vadd.f32 %v486, %v754
    %v756 = vpop.f32.mrb[0].mxu0
    %v757 = vpop.f32.mrb[0].mxu0
    %v758 = vadd.f32 %v486, %v757
    %v759 = vpop.f32.mrb[0].mxu0
    %760 = vmatprep.mubr.bf16.mxu0 %v605
    %761 = vmatmul.mubr.bf16.gmra.mrb[0].mxu0 %v604
    %v762 = vpop.f32.mrb[0].mxu0
    %v763 = vadd.f32 %v486, %v762
    %v764 = vpop.f32.mrb[0].mxu0
    %v765 = vpop.f32.mrb[0].mxu0
    %v766 = vadd.f32 %v486, %v765
    %v767 = vpop.f32.mrb[0].mxu0
    %768 = vmatprep.mubr.bf16.mxu0 %v607
    %769 = vmatmul.mubr.bf16.gmra.mrb[0].mxu0 %v606
    %v770 = vpop.f32.mrb[0].mxu0
    %v771 = vadd.f32 %v486, %v770
    %v772 = vpop.f32.mrb[0].mxu0
    %v773 = vpop.f32.mrb[0].mxu0
    %v774 = vadd.f32 %v486, %v773
    %v775 = vpop.f32.mrb[0].mxu0
    %776 = vmatprep.mubr.bf16.mxu0 %v609
    %777 = vmatmul.mubr.bf16.gmra.mrb[0].mxu0 %v608
    %v778 = vpop.f32.mrb[0].mxu0
    %v779 = vadd.f32 %v486, %v778
    %v780 = vpop.f32.mrb[0].mxu0
    %v781 = vpop.f32.mrb[0].mxu0
    %v782 = vadd.f32 %v486, %v781
    %v783 = vpop.f32.mrb[0].mxu0
    %784 = vmatprep.mubr.bf16.mxu0 %v611
    %785 = vmatmul.mubr.bf16.gmra.mrb[0].mxu0 %v610
    %v786 = vpop.f32.mrb[0].mxu0
    %v787 = vadd.f32 %v486, %v786
    %v788 = vpop.f32.mrb[0].mxu0
    %v789 = vpop.f32.mrb[0].mxu0
    %v790 = vadd.f32 %v486, %v789
    %v791 = vpop.f32.mrb[0].mxu0
    %792 = vmatprep.mubr.bf16.mxu0 %v613
    %793 = vmatmul.mubr.bf16.gmra.mrb[0].mxu0 %v612
    %v794 = vpop.f32.mrb[0].mxu0
    %v795 = vadd.f32 %v486, %v794
    %v796 = vpop.f32.mrb[0].mxu0
    %v797 = vpop.f32.mrb[0].mxu0
    %v798 = vadd.f32 %v486, %v797
    %v799 = vpop.f32.mrb[0].mxu0
    %800 = vmatprep.mubr.bf16.mxu0 %v615
    %801 = vmatmul.mubr.bf16.gmra.mrb[0].mxu0 %v614
    %v802 = vpop.f32.mrb[0].mxu0
    %v803 = vadd.f32 %v486, %v802
    %v804 = vpop.f32.mrb[0].mxu0
    %v805 = vpop.f32.mrb[0].mxu0
    %v806 = vadd.f32 %v486, %v805
    %v807 = vpop.f32.mrb[0].mxu0
    %808 = vdwg.mxu0
    %v809 = vmax.f32 %v683, 0.0
    %v810 = vmax.f32 %v686, 0.0
    %v811 = vmax.f32 %v691, 0.0
    %v812 = vmax.f32 %v694, 0.0
    %v813 = vmax.f32 %v699, 0.0
    %v814 = vmax.f32 %v702, 0.0
    %v815 = vmax.f32 %v707, 0.0
    %v816 = vmax.f32 %v710, 0.0
    %v817 = vmax.f32 %v715, 0.0
    %v818 = vmax.f32 %v718, 0.0
    %v819 = vmax.f32 %v723, 0.0
    %v820 = vmax.f32 %v726, 0.0
    %v821 = vmax.f32 %v731, 0.0
    %v822 = vmax.f32 %v734, 0.0
    %v823 = vmax.f32 %v739, 0.0
    %v824 = vmax.f32 %v742, 0.0
    %v825 = vmax.f32 %v747, 0.0
    %v826 = vmax.f32 %v750, 0.0
    %v827 = vmax.f32 %v755, 0.0
    %v828 = vmax.f32 %v758, 0.0
    %v829 = vmax.f32 %v763, 0.0
    %v830 = vmax.f32 %v766, 0.0
    %v831 = vmax.f32 %v771, 0.0
    %v832 = vmax.f32 %v774, 0.0
    %v833 = vmax.f32 %v779, 0.0
    %v834 = vmax.f32 %v782, 0.0
    %v835 = vmax.f32 %v787, 0.0
    %v836 = vmax.f32 %v790, 0.0
    %v837 = vmax.f32 %v795, 0.0
    %v838 = vmax.f32 %v798, 0.0
    %v839 = vmax.f32 %v803, 0.0
    %v840 = vmax.f32 %v806, 0.0
    %v841 = vpack.c.bf16 %v810, %v809
    %v842 = vpack.c.bf16 %v812, %v811
    %v843 = vpack.c.bf16 %v814, %v813
    %v844 = vpack.c.bf16 %v816, %v815
    %v845 = vpack.c.bf16 %v818, %v817
    %v846 = vpack.c.bf16 %v820, %v819
    %v847 = vpack.c.bf16 %v822, %v821
    %v848 = vpack.c.bf16 %v824, %v823
    %v849 = vpack.c.bf16 %v826, %v825
    %v850 = vpack.c.bf16 %v828, %v827
    %v851 = vpack.c.bf16 %v830, %v829
    %v852 = vpack.c.bf16 %v832, %v831
    %v853 = vpack.c.bf16 %v834, %v833
    %v854 = vpack.c.bf16 %v836, %v835
    %v855 = vpack.c.bf16 %v838, %v837
    %v856 = vpack.c.bf16 %v840, %v839
    %v857 = vld [vmem:[#allocation8] sm:$0xf]
    %v858 = vld [vmem:[#allocation8 + $0x4] sm:$0xf]
    %v859 = vld [vmem:[#allocation8 + $0x8] sm:$0xf]
    %v860 = vld [vmem:[#allocation8 + $0xc] sm:$0xf]
    %v861 = vld [vmem:[#allocation8 + $0x10] sm:$0xf]
    %v862 = vld [vmem:[#allocation8 + $0x14] sm:$0xf]
    %v863 = vld [vmem:[#allocation8 + $0x18] sm:$0xf]
    %v864 = vld [vmem:[#allocation8 + $0x1c] sm:$0xf]
    %v865 = vld [vmem:[#allocation8 + $0x20] sm:$0xf]
    %v866 = vld [vmem:[#allocation8 + $0x24] sm:$0xf]
    %v867 = vld [vmem:[#allocation8 + $0x28] sm:$0xf]
    %v868 = vld [vmem:[#allocation8 + $0x2c] sm:$0xf]
    %v869 = vld [vmem:[#allocation8 + $0x30] sm:$0xf]
    %v870 = vld [vmem:[#allocation8 + $0x34] sm:$0xf]
    %v871 = vld [vmem:[#allocation8 + $0x38] sm:$0xf]
    %v872 = vld [vmem:[#allocation8 + $0x3c] sm:$0xf]
    %v889 = vunpack.c.l.b16 %v857
    %v890 = vunpack.c.l.b16 %v858
    %v891 = vunpack.c.l.b16 %v859
    %v892 = vunpack.c.l.b16 %v860
    %v893 = vunpack.c.l.b16 %v861
    %v894 = vunpack.c.l.b16 %v862
    %v895 = vunpack.c.l.b16 %v863
    %v896 = vunpack.c.l.b16 %v864
    %v897 = vunpack.c.l.b16 %v865
    %v898 = vunpack.c.l.b16 %v866
    %v899 = vunpack.c.l.b16 %v867
    %v900 = vunpack.c.l.b16 %v868
    %v901 = vunpack.c.l.b16 %v869
    %v902 = vunpack.c.l.b16 %v870
    %v903 = vunpack.c.l.b16 %v871
    %v904 = vunpack.c.l.b16 %v872
    %v905 = vpack.c.b16 %v890, %v889
    %v906 = vpack.c.b16 %v892, %v891
    %v907 = vpack.c.b16 %v894, %v893
    %v908 = vpack.c.b16 %v896, %v895
    %v909 = vpack.c.b16 %v898, %v897
    %v910 = vpack.c.b16 %v900, %v899
    %v911 = vpack.c.b16 %v902, %v901
    %v912 = vpack.c.b16 %v904, %v903
    %921 = vmatprep.subr.bf16.mxu0 0
    %922 = vmatpush1.bf16.msra.mxu0 %v905
    %923 = vmatprep.subr.bf16.mxu0 0
    %924 = vmatpush1.bf16.msra.mxu0 %v906
    %925 = vmatprep.subr.bf16.mxu0 0
    %926 = vmatpush1.bf16.msra.mxu0 %v907
    %927 = vmatprep.subr.bf16.mxu0 0
    %928 = vmatpush1.bf16.msra.mxu0 %v908
    %929 = vmatprep.subr.bf16.mxu0 0
    %930 = vmatpush1.bf16.msra.mxu0 %v909
    %931 = vmatprep.subr.bf16.mxu0 0
    %932 = vmatpush1.bf16.msra.mxu0 %v910
    %933 = vmatprep.subr.bf16.mxu0 0
    %934 = vmatpush1.bf16.msra.mxu0 %v911
    %935 = vmatprep.subr.bf16.mxu0 0
    %936 = vmatpush1.bf16.msra.mxu0 %v912
    %937 = vmatprep.subr.bf16.mxu0 0
    %938 = vmatpush1.bf16.msra.mxu0 0
    %939 = vmatprep.subr.bf16.mxu0 0
    %940 = vmatpush1.bf16.msra.mxu0 0
    %941 = vmatprep.subr.bf16.mxu0 0
    %942 = vmatpush1.bf16.msra.mxu0 0
    %943 = vmatprep.subr.bf16.mxu0 0
    %944 = vmatpush1.bf16.msra.mxu0 0
    %945 = vmatprep.subr.bf16.mxu0 0
    %946 = vmatpush1.bf16.msra.mxu0 0
    %947 = vmatprep.subr.bf16.mxu0 0
    %948 = vmatpush1.bf16.msra.mxu0 0
    %949 = vmatprep.subr.bf16.mxu0 0
    %950 = vmatpush1.bf16.msra.mxu0 0
    %951 = vmatprep.subr.bf16.mxu0 0
    %952 = vmatpush1.bf16.msra.mxu0 0
    %953 = vmatprep.mubr.bf16.mxu0 0
    %954 = vmatmul.mubr.bf16.gmra.mrb[0].mxu0 %v841
    %v955 = vpop.f32.mrb[0].mxu0
    %v956 = vadd.f32 0.0, %v955
    %v957 = vpop.f32.mrb[0].mxu0
    %v958 = vpop.f32.mrb[0].mxu0
    %v959 = vadd.f32 0.0, %v958
    %v960 = vpop.f32.mrb[0].mxu0
    %961 = vmatprep.mubr.bf16.mxu0 0
    %962 = vmatmul.mubr.bf16.gmra.mrb[0].mxu0 %v842
    %v963 = vpop.f32.mrb[0].mxu0
    %v964 = vadd.f32 0.0, %v963
    %v965 = vpop.f32.mrb[0].mxu0
    %v966 = vpop.f32.mrb[0].mxu0
    %v967 = vadd.f32 0.0, %v966
    %v968 = vpop.f32.mrb[0].mxu0
    %969 = vmatprep.mubr.bf16.mxu0 0
    %970 = vmatmul.mubr.bf16.gmra.mrb[0].mxu0 %v843
    %v971 = vpop.f32.mrb[0].mxu0
    %v972 = vadd.f32 0.0, %v971
    %v973 = vpop.f32.mrb[0].mxu0
    %v974 = vpop.f32.mrb[0].mxu0
    %v975 = vadd.f32 0.0, %v974
    %v976 = vpop.f32.mrb[0].mxu0
    %977 = vmatprep.mubr.bf16.mxu0 0
    %978 = vmatmul.mubr.bf16.gmra.mrb[0].mxu0 %v844
    %v979 = vpop.f32.mrb[0].mxu0
    %v980 = vadd.f32 0.0, %v979
    %v981 = vpop.f32.mrb[0].mxu0
    %v982 = vpop.f32.mrb[0].mxu0
    %v983 = vadd.f32 0.0, %v982
    %v984 = vpop.f32.mrb[0].mxu0
    %985 = vmatprep.mubr.bf16.mxu0 0
    %986 = vmatmul.mubr.bf16.gmra.mrb[0].mxu0 %v845
    %v987 = vpop.f32.mrb[0].mxu0
    %v988 = vadd.f32 0.0, %v987
    %v989 = vpop.f32.mrb[0].mxu0
    %v990 = vpop.f32.mrb[0].mxu0
    %v991 = vadd.f32 0.0, %v990
    %v992 = vpop.f32.mrb[0].mxu0
    %993 = vmatprep.mubr.bf16.mxu0 0
    %994 = vmatmul.mubr.bf16.gmra.mrb[0].mxu0 %v846
    %v995 = vpop.f32.mrb[0].mxu0
    %v996 = vadd.f32 0.0, %v995
    %v997 = vpop.f32.mrb[0].mxu0
    %v998 = vpop.f32.mrb[0].mxu0
    %v999 = vadd.f32 0.0, %v998
    %v1000 = vpop.f32.mrb[0].mxu0
    %1001 = vmatprep.mubr.bf16.mxu0 0
    %1002 = vmatmul.mubr.bf16.gmra.mrb[0].mxu0 %v847
    %v1003 = vpop.f32.mrb[0].mxu0
    %v1004 = vadd.f32 0.0, %v1003
    %v1005 = vpop.f32.mrb[0].mxu0
    %v1006 = vpop.f32.mrb[0].mxu0
    %v1007 = vadd.f32 0.0, %v1006
    %v1008 = vpop.f32.mrb[0].mxu0
    %1009 = vmatprep.mubr.bf16.mxu0 0
    %1010 = vmatmul.mubr.bf16.gmra.mrb[0].mxu0 %v848
    %v1011 = vpop.f32.mrb[0].mxu0
    %v1012 = vadd.f32 0.0, %v1011
    %v1013 = vpop.f32.mrb[0].mxu0
    %v1014 = vpop.f32.mrb[0].mxu0
    %v1015 = vadd.f32 0.0, %v1014
    %v1016 = vpop.f32.mrb[0].mxu0
    %1017 = vmatprep.mubr.bf16.mxu0 0
    %1018 = vmatmul.mubr.bf16.gmra.mrb[0].mxu0 %v849
    %v1019 = vpop.f32.mrb[0].mxu0
    %v1020 = vadd.f32 0.0, %v1019
    %v1021 = vpop.f32.mrb[0].mxu0
    %v1022 = vpop.f32.mrb[0].mxu0
    %v1023 = vadd.f32 0.0, %v1022
    %v1024 = vpop.f32.mrb[0].mxu0
    %1025 = vmatprep.mubr.bf16.mxu0 0
    %1026 = vmatmul.mubr.bf16.gmra.mrb[0].mxu0 %v850
    %v1027 = vpop.f32.mrb[0].mxu0
    %v1028 = vadd.f32 0.0, %v1027
    %v1029 = vpop.f32.mrb[0].mxu0
    %v1030 = vpop.f32.mrb[0].mxu0
    %v1031 = vadd.f32 0.0, %v1030
    %v1032 = vpop.f32.mrb[0].mxu0
    %1033 = vmatprep.mubr.bf16.mxu0 0
    %1034 = vmatmul.mubr.bf16.gmra.mrb[0].mxu0 %v851
    %v1035 = vpop.f32.mrb[0].mxu0
    %v1036 = vadd.f32 0.0, %v1035
    %v1037 = vpop.f32.mrb[0].mxu0
    %v1038 = vpop.f32.mrb[0].mxu0
    %v1039 = vadd.f32 0.0, %v1038
    %v1040 = vpop.f32.mrb[0].mxu0
    %1041 = vmatprep.mubr.bf16.mxu0 0
    %1042 = vmatmul.mubr.bf16.gmra.mrb[0].mxu0 %v852
    %v1043 = vpop.f32.mrb[0].mxu0
    %v1044 = vadd.f32 0.0, %v1043
    %v1045 = vpop.f32.mrb[0].mxu0
    %v1046 = vpop.f32.mrb[0].mxu0
    %v1047 = vadd.f32 0.0, %v1046
    %v1048 = vpop.f32.mrb[0].mxu0
    %1049 = vmatprep.mubr.bf16.mxu0 0
    %1050 = vmatmul.mubr.bf16.gmra.mrb[0].mxu0 %v853
    %v1051 = vpop.f32.mrb[0].mxu0
    %v1052 = vadd.f32 0.0, %v1051
    %v1053 = vpop.f32.mrb[0].mxu0
    %v1054 = vpop.f32.mrb[0].mxu0
    %v1055 = vadd.f32 0.0, %v1054
    %v1056 = vpop.f32.mrb[0].mxu0
    %1057 = vmatprep.mubr.bf16.mxu0 0
    %1058 = vmatmul.mubr.bf16.gmra.mrb[0].mxu0 %v854
    %v1059 = vpop.f32.mrb[0].mxu0
    %v1060 = vadd.f32 0.0, %v1059
    %v1061 = vpop.f32.mrb[0].mxu0
    %v1062 = vpop.f32.mrb[0].mxu0
    %v1063 = vadd.f32 0.0, %v1062
    %v1064 = vpop.f32.mrb[0].mxu0
    %1065 = vmatprep.mubr.bf16.mxu0 0
    %1066 = vmatmul.mubr.bf16.gmra.mrb[0].mxu0 %v855
    %v1067 = vpop.f32.mrb[0].mxu0
    %v1068 = vadd.f32 0.0, %v1067
    %v1069 = vpop.f32.mrb[0].mxu0
    %v1070 = vpop.f32.mrb[0].mxu0
    %v1071 = vadd.f32 0.0, %v1070
    %v1072 = vpop.f32.mrb[0].mxu0
    %1073 = vmatprep.mubr.bf16.mxu0 0
    %1074 = vmatmul.mubr.bf16.gmra.mrb[0].mxu0 %v856
    %v1075 = vpop.f32.mrb[0].mxu0
    %v1076 = vadd.f32 0.0, %v1075
    %v1077 = vpop.f32.mrb[0].mxu0
    %v1078 = vpop.f32.mrb[0].mxu0
    %v1079 = vadd.f32 0.0, %v1078
    %v1080 = vpop.f32.mrb[0].mxu0
    %1081 = vdwg.mxu0
    %v1082 = vpack.c.bf16 %v959, %v956
    %v1083 = vpack.c.bf16 %v967, %v964
    %v1084 = vpack.c.bf16 %v975, %v972
    %v1085 = vpack.c.bf16 %v983, %v980
    %v1086 = vpack.c.bf16 %v991, %v988
    %v1087 = vpack.c.bf16 %v999, %v996
    %v1088 = vpack.c.bf16 %v1007, %v1004
    %v1089 = vpack.c.bf16 %v1015, %v1012
    %v1090 = vpack.c.bf16 %v1023, %v1020
    %v1091 = vpack.c.bf16 %v1031, %v1028
    %v1092 = vpack.c.bf16 %v1039, %v1036
    %v1093 = vpack.c.bf16 %v1047, %v1044
    %v1094 = vpack.c.bf16 %v1055, %v1052
    %v1095 = vpack.c.bf16 %v1063, %v1060
    %v1096 = vpack.c.bf16 %v1071, %v1068
    %v1097 = vpack.c.bf16 %v1079, %v1076
    %v1098 = vld [vmem:[%s5] sm:$0x1]
    %v1100 = vlaneseq
    %v1101 = vshrl.u32 %v1100, 7
    %v1102 = vsub.s32 0, %v1101
    %v1103 = vrot.slane %v1098, %v1102
    %1105 = vmatprep.subr.bf16.mxu0 0
    %1106 = vmatpush1.bf16.msra.mxu0 %v1082
    %1107 = vmatprep.subr.bf16.mxu0 0
    %1108 = vmatpush1.bf16.msra.mxu0 %v1083
    %1109 = vmatprep.subr.bf16.mxu0 0
    %1110 = vmatpush1.bf16.msra.mxu0 %v1084
    %1111 = vmatprep.subr.bf16.mxu0 0
    %1112 = vmatpush1.bf16.msra.mxu0 %v1085
    %1113 = vmatprep.subr.bf16.mxu0 0
    %1114 = vmatpush1.bf16.msra.mxu0 %v1086
    %1115 = vmatprep.subr.bf16.mxu0 0
    %1116 = vmatpush1.bf16.msra.mxu0 %v1087
    %1117 = vmatprep.subr.bf16.mxu0 0
    %1118 = vmatpush1.bf16.msra.mxu0 %v1088
    %1119 = vmatprep.subr.bf16.mxu0 0
    %1120 = vmatpush1.bf16.msra.mxu0 %v1089
    %1121 = vmatprep.subr.bf16.mxu0 0
    %1122 = vmatpush1.bf16.msra.mxu0 %v1090
    %1123 = vmatprep.subr.bf16.mxu0 0
    %1124 = vmatpush1.bf16.msra.mxu0 %v1091
    %1125 = vmatprep.subr.bf16.mxu0 0
    %1126 = vmatpush1.bf16.msra.mxu0 %v1092
    %1127 = vmatprep.subr.bf16.mxu0 0
    %1128 = vmatpush1.bf16.msra.mxu0 %v1093
    %1129 = vmatprep.subr.bf16.mxu0 0
    %1130 = vmatpush1.bf16.msra.mxu0 %v1094
    %1131 = vmatprep.subr.bf16.mxu0 0
    %1132 = vmatpush1.bf16.msra.mxu0 %v1095
    %1133 = vmatprep.subr.bf16.mxu0 0
    %1134 = vmatpush1.bf16.msra.mxu0 %v1096
    %1135 = vmatprep.subr.bf16.mxu0 0
    %1136 = vmatpush1.bf16.msra.mxu0 %v1097
    %1137 = vmatprep.mubr.bf16.mxu0 %v585
    %1138 = vmatmul.mubr.bf16.gmra.mrb[0].mxu0 %v584
    %v1139 = vpop.f32.mrb[0].mxu0
    %v1140 = vadd.f32 %v1103, %v1139
    %v1141 = vpop.f32.mrb[0].mxu0
    %v1142 = vpop.f32.mrb[0].mxu0
    %v1143 = vadd.f32 %v1103, %v1142
    %v1144 = vpop.f32.mrb[0].mxu0
    %1145 = vmatprep.mubr.bf16.mxu0 %v587
    %1146 = vmatmul.mubr.bf16.gmra.mrb[0].mxu0 %v586
    %v1147 = vpop.f32.mrb[0].mxu0
    %v1148 = vadd.f32 %v1103, %v1147
    %v1149 = vpop.f32.mrb[0].mxu0
    %v1150 = vpop.f32.mrb[0].mxu0
    %v1151 = vadd.f32 %v1103, %v1150
    %v1152 = vpop.f32.mrb[0].mxu0
    %1153 = vmatprep.mubr.bf16.mxu0 %v589
    %1154 = vmatmul.mubr.bf16.gmra.mrb[0].mxu0 %v588
    %v1155 = vpop.f32.mrb[0].mxu0
    %v1156 = vadd.f32 %v1103, %v1155
    %v1157 = vpop.f32.mrb[0].mxu0
    %v1158 = vpop.f32.mrb[0].mxu0
    %v1159 = vadd.f32 %v1103, %v1158
    %v1160 = vpop.f32.mrb[0].mxu0
    %1161 = vmatprep.mubr.bf16.mxu0 %v591
    %1162 = vmatmul.mubr.bf16.gmra.mrb[0].mxu0 %v590
    %v1163 = vpop.f32.mrb[0].mxu0
    %v1164 = vadd.f32 %v1103, %v1163
    %v1165 = vpop.f32.mrb[0].mxu0
    %v1166 = vpop.f32.mrb[0].mxu0
    %v1167 = vadd.f32 %v1103, %v1166
    %v1168 = vpop.f32.mrb[0].mxu0
    %1169 = vmatprep.mubr.bf16.mxu0 %v593
    %1170 = vmatmul.mubr.bf16.gmra.mrb[0].mxu0 %v592
    %v1171 = vpop.f32.mrb[0].mxu0
    %v1172 = vadd.f32 %v1103, %v1171
    %v1173 = vpop.f32.mrb[0].mxu0
    %v1174 = vpop.f32.mrb[0].mxu0
    %v1175 = vadd.f32 %v1103, %v1174
    %v1176 = vpop.f32.mrb[0].mxu0
    %1177 = vmatprep.mubr.bf16.mxu0 %v595
    %1178 = vmatmul.mubr.bf16.gmra.mrb[0].mxu0 %v594
    %v1179 = vpop.f32.mrb[0].mxu0
    %v1180 = vadd.f32 %v1103, %v1179
    %v1181 = vpop.f32.mrb[0].mxu0
    %v1182 = vpop.f32.mrb[0].mxu0
    %v1183 = vadd.f32 %v1103, %v1182
    %v1184 = vpop.f32.mrb[0].mxu0
    %1185 = vmatprep.mubr.bf16.mxu0 %v597
    %1186 = vmatmul.mubr.bf16.gmra.mrb[0].mxu0 %v596
    %v1187 = vpop.f32.mrb[0].mxu0
    %v1188 = vadd.f32 %v1103, %v1187
    %v1189 = vpop.f32.mrb[0].mxu0
    %v1190 = vpop.f32.mrb[0].mxu0
    %v1191 = vadd.f32 %v1103, %v1190
    %v1192 = vpop.f32.mrb[0].mxu0
    %1193 = vmatprep.mubr.bf16.mxu0 %v599
    %1194 = vmatmul.mubr.bf16.gmra.mrb[0].mxu0 %v598
    %v1195 = vpop.f32.mrb[0].mxu0
    %v1196 = vadd.f32 %v1103, %v1195
    %v1197 = vpop.f32.mrb[0].mxu0
    %v1198 = vpop.f32.mrb[0].mxu0
    %v1199 = vadd.f32 %v1103, %v1198
    %v1200 = vpop.f32.mrb[0].mxu0
    %1201 = vmatprep.mubr.bf16.mxu0 %v601
    %1202 = vmatmul.mubr.bf16.gmra.mrb[0].mxu0 %v600
    %v1203 = vpop.f32.mrb[0].mxu0
    %v1204 = vadd.f32 %v1103, %v1203
    %v1205 = vpop.f32.mrb[0].mxu0
    %v1206 = vpop.f32.mrb[0].mxu0
    %v1207 = vadd.f32 %v1103, %v1206
    %v1208 = vpop.f32.mrb[0].mxu0
    %1209 = vmatprep.mubr.bf16.mxu0 %v603
    %1210 = vmatmul.mubr.bf16.gmra.mrb[0].mxu0 %v602
    %v1211 = vpop.f32.mrb[0].mxu0
    %v1212 = vadd.f32 %v1103, %v1211
    %v1213 = vpop.f32.mrb[0].mxu0
    %v1214 = vpop.f32.mrb[0].mxu0
    %v1215 = vadd.f32 %v1103, %v1214
    %v1216 = vpop.f32.mrb[0].mxu0
    %1217 = vmatprep.mubr.bf16.mxu0 %v605
    %1218 = vmatmul.mubr.bf16.gmra.mrb[0].mxu0 %v604
    %v1219 = vpop.f32.mrb[0].mxu0
    %v1220 = vadd.f32 %v1103, %v1219
    %v1221 = vpop.f32.mrb[0].mxu0
    %v1222 = vpop.f32.mrb[0].mxu0
    %v1223 = vadd.f32 %v1103, %v1222
    %v1224 = vpop.f32.mrb[0].mxu0
    %1225 = vmatprep.mubr.bf16.mxu0 %v607
    %1226 = vmatmul.mubr.bf16.gmra.mrb[0].mxu0 %v606
    %v1227 = vpop.f32.mrb[0].mxu0
    %v1228 = vadd.f32 %v1103, %v1227
    %v1229 = vpop.f32.mrb[0].mxu0
    %v1230 = vpop.f32.mrb[0].mxu0
    %v1231 = vadd.f32 %v1103, %v1230
    %v1232 = vpop.f32.mrb[0].mxu0
    %1233 = vmatprep.mubr.bf16.mxu0 %v609
    %1234 = vmatmul.mubr.bf16.gmra.mrb[0].mxu0 %v608
    %v1235 = vpop.f32.mrb[0].mxu0
    %v1236 = vadd.f32 %v1103, %v1235
    %v1237 = vpop.f32.mrb[0].mxu0
    %v1238 = vpop.f32.mrb[0].mxu0
    %v1239 = vadd.f32 %v1103, %v1238
    %v1240 = vpop.f32.mrb[0].mxu0
    %1241 = vmatprep.mubr.bf16.mxu0 %v611
    %1242 = vmatmul.mubr.bf16.gmra.mrb[0].mxu0 %v610
    %v1243 = vpop.f32.mrb[0].mxu0
    %v1244 = vadd.f32 %v1103, %v1243
    %v1245 = vpop.f32.mrb[0].mxu0
    %v1246 = vpop.f32.mrb[0].mxu0
    %v1247 = vadd.f32 %v1103, %v1246
    %v1248 = vpop.f32.mrb[0].mxu0
    %1249 = vmatprep.mubr.bf16.mxu0 %v613
    %1250 = vmatmul.mubr.bf16.gmra.mrb[0].mxu0 %v612
    %v1251 = vpop.f32.mrb[0].mxu0
    %v1252 = vadd.f32 %v1103, %v1251
    %v1253 = vpop.f32.mrb[0].mxu0
    %v1254 = vpop.f32.mrb[0].mxu0
    %v1255 = vadd.f32 %v1103, %v1254
    %v1256 = vpop.f32.mrb[0].mxu0
    %1257 = vmatprep.mubr.bf16.mxu0 %v615
    %1258 = vmatmul.mubr.bf16.gmra.mrb[0].mxu0 %v614
    %v1259 = vpop.f32.mrb[0].mxu0
    %v1260 = vadd.f32 %v1103, %v1259
    %v1261 = vpop.f32.mrb[0].mxu0
    %v1262 = vpop.f32.mrb[0].mxu0
    %v1263 = vadd.f32 %v1103, %v1262
    %v1264 = vpop.f32.mrb[0].mxu0
    %1265 = vdwg.mxu0
    %1266 = vst [vmem:[#allocation10] sm:$0xff] %v1140
    %1267 = vst [vmem:[#allocation10 + $0x8] sm:$0xff] %v1143
    %1268 = vst [vmem:[#allocation10 + $0x10] sm:$0xff] %v1148
    %1269 = vst [vmem:[#allocation10 + $0x18] sm:$0xff] %v1151
    %1270 = vst [vmem:[#allocation10 + $0x20] sm:$0xff] %v1156
    %1271 = vst [vmem:[#allocation10 + $0x28] sm:$0xff] %v1159
    %1272 = vst [vmem:[#allocation10 + $0x30] sm:$0xff] %v1164
    %1273 = vst [vmem:[#allocation10 + $0x38] sm:$0xff] %v1167
    %1274 = vst [vmem:[#allocation10 + $0x40] sm:$0xff] %v1172
    %1275 = vst [vmem:[#allocation10 + $0x48] sm:$0xff] %v1175
    %1276 = vst [vmem:[#allocation10 + $0x50] sm:$0xff] %v1180
    %1277 = vst [vmem:[#allocation10 + $0x58] sm:$0xff] %v1183
    %1278 = vst [vmem:[#allocation10 + $0x60] sm:$0xff] %v1188
    %1279 = vst [vmem:[#allocation10 + $0x68] sm:$0xff] %v1191
    %1280 = vst [vmem:[#allocation10 + $0x70] sm:$0xff] %v1196
    %1281 = vst [vmem:[#allocation10 + $0x78] sm:$0xff] %v1199
    %1282 = vst [vmem:[#allocation10 + $0x80] sm:$0xff] %v1204
    %1283 = vst [vmem:[#allocation10 + $0x88] sm:$0xff] %v1207
    %1284 = vst [vmem:[#allocation10 + $0x90] sm:$0xff] %v1212
    %1285 = vst [vmem:[#allocation10 + $0x98] sm:$0xff] %v1215
    %1286 = vst [vmem:[#allocation10 + $0xa0] sm:$0xff] %v1220
    %1287 = vst [vmem:[#allocation10 + $0xa8] sm:$0xff] %v1223
    %1288 = vst [vmem:[#allocation10 + $0xb0] sm:$0xff] %v1228
    %1289 = vst [vmem:[#allocation10 + $0xb8] sm:$0xff] %v1231
    %1290 = vst [vmem:[#allocation10 + $0xc0] sm:$0xff] %v1236
    %1291 = vst [vmem:[#allocation10 + $0xc8] sm:$0xff] %v1239
    %1292 = vst [vmem:[#allocation10 + $0xd0] sm:$0xff] %v1244
    %1293 = vst [vmem:[#allocation10 + $0xd8] sm:$0xff] %v1247
    %1294 = vst [vmem:[#allocation10 + $0xe0] sm:$0xff] %v1252
    %1295 = vst [vmem:[#allocation10 + $0xe8] sm:$0xff] %v1255
    %1296 = vst [vmem:[#allocation10 + $0xf0] sm:$0xff] %v1260
    %1297 = vst [vmem:[#allocation10 + $0xf8] sm:$0xff] %v1263
    // Predicated region
    $region42: #{tpu_custom_call.1} parent=1 // pred_check
      _
    $region43: #{tpu_custom_call.1} parent=1 // pred_check_branch
      %1299 = sbr.rel (0) target = $region45
    $region44: #{tpu_custom_call.1} parent=1 // pred_region
      %s1301 = ssub.s32 4096, 4096
      %1302 = vsyncadd [#allocation4], %s1301
      %s1303 = sshll.u32 [#allocation10], 4
      %s1304 = int_to_ptr.vmem [resolvable:$true] %s1303
      %1309 = dma.vmem_to_hbm [thread:$0]  %s1304, 4096, %s6, [#allocation4], 128, 128, 8
    $region45: #{tpu_custom_call.1} parent=1 // pred_fallthru
      _
    // Predicated region
    $region46: #{tpu_custom_call.1} parent=1 // pred_check
      _
    $region47: #{tpu_custom_call.1} parent=1 // pred_check_branch
      %1311 = sbr.rel (0) target = $region49
    $region48: #{tpu_custom_call.1} parent=1 // pred_region
      %1312 = dma.done [#allocation4], 4096
    $region49: #{tpu_custom_call.1} parent=1 // pred_fallthru
      _
    %1313 = vsyncpa [#allocation3], 1
    %1314 = vsyncpa [#allocation6], 1
    %1315 = vsyncpa [#allocation9], 1
    %1316 = vsyncpa [#allocation4], 1

</llo_original>
